<compile_context>
chip_gen: v5e
topology: v5e:2x2
jax: 0.10.0
libtpu: 0.0.40
codegen_flags: <defaults>
</compile_context>

<pallas_src>
from math import sqrt

import jax
import jax.numpy as jnp
import numpy as np
from jax import lax
from jax.experimental import pallas as pl
from jax.experimental.pallas import tpu as pltpu

VMEM = pltpu.MemorySpace.VMEM
SMEM = pltpu.MemorySpace.SMEM

# Channel plan of the PyTorch module.
FROM_GRAY_OUT = [512, 256, 128, 64, 32, 16, 8]      # index == step (resolution 4 * 2**step)
PROG_IN = [None, 257, 128, 64, 32, 16, 8]           # progression_8 .. progression_256
PROG_OUT = [None, 512, 256, 128, 64, 32, 16]

LRELU_SLOPE = 0.2


# ---------------------------------------------------------------------------
# 1x1 conv (from_gray_*), tiled over M = N*H*W rows.
# ---------------------------------------------------------------------------
def _conv1x1_kernel(x_ref, w_ref, b_ref, o_ref):
    o_ref[...] = (
        jnp.dot(x_ref[...], w_ref[...], preferred_element_type=jnp.float32)
        + b_ref[...]
    )


def conv1x1(x_nhwc, w, b):
    N, H, W, Cin = x_nhwc.shape
    Cout = w.shape[1]
    M = N * H * W
    BM = 1024 if M % 1024 == 0 else M
    xm = x_nhwc.reshape(M, Cin)
    out = pl.pallas_call(
        _conv1x1_kernel,
        out_shape=jax.ShapeDtypeStruct((M, Cout), jnp.float32),
        grid=(M // BM,),
        in_specs=[
            pl.BlockSpec((BM, Cin), lambda i: (i, 0)),
            pl.BlockSpec((Cin, Cout), lambda i: (0, 0)),
            pl.BlockSpec((1, Cout), lambda i: (0, 0)),
        ],
        out_specs=pl.BlockSpec((BM, Cout), lambda i: (i, 0)),
        compiler_params=pltpu.CompilerParams(dimension_semantics=("parallel",)),
    )(xm, w, b.reshape(1, Cout))
    return out.reshape(N, H, W, Cout)


# ---------------------------------------------------------------------------
# Fused 3x3 conv (pad=1) + LeakyReLU(0.2) + 2x2 average pool.
# Grid: (batch, pooled-row blocks).  The full image of one batch element stays
# resident in VMEM; each grid step builds a small zero-padded row strip in a
# scratch buffer (handles the halo in-kernel, no XLA pad), runs nine bf16 MXU
# matmuls with f32 accumulation, and writes the pooled H/2 x W/2 block.
# ---------------------------------------------------------------------------
def _make_conv3x3_pool_kernel(BHO, H, W, Cin, Cout, n_rb):
    S = 2 * BHO + 2  # strip rows: 2*BHO conv rows + 1-row halo on each side

    def kernel(x_ref, w_ref, b_ref, o_ref, strip_ref, rs_ref):
        rb = pl.program_id(1)
        row0 = pl.multiple_of(rb * (2 * BHO), 8)   # first conv-output row of this block

        # Zero-padded input strip: logical rows row0-1 .. row0+2*BHO, cols -1 .. W.
        strip_ref[...] = jnp.zeros((S, W + 2, Cin), jnp.float32)
        strip_ref[1:1 + 2 * BHO, 1:W + 1, :] = x_ref[0, pl.ds(row0, 2 * BHO), :, :]

        @pl.when(rb > 0)
        def _():
            strip_ref[0:1, 1:W + 1, :] = x_ref[0, pl.ds(row0 - 1, 1), :, :]

        @pl.when(rb < n_rb - 1)
        def _():
            strip_ref[2 * BHO + 1:2 * BHO + 2, 1:W + 1, :] = (
                x_ref[0, pl.ds(row0 + 2 * BHO, 1), :, :])

        # 3x3 conv as nine matmuls (bf16 operands, f32 accumulation on the MXU).
        wb = w_ref[...].astype(jnp.bfloat16)               # (9, Cin, Cout)
        acc = jnp.zeros((2 * BHO * W, Cout), jnp.float32)
        for dy in range(3):
            for dx in range(3):
                patch = strip_ref[dy:dy + 2 * BHO, dx:dx + W, :]
                patch = patch.reshape(2 * BHO * W, Cin).astype(jnp.bfloat16)
                acc = acc + jnp.dot(patch, wb[3 * dy + dx],
                                    preferred_element_type=jnp.float32)
        acc = acc + b_ref[...]
        acc = jnp.where(acc >= 0.0, acc, LRELU_SLOPE * acc)

        # Fused 2x2 average pool: rows via a leading-dim reshape, columns via
        # strided reads from a VMEM scratch.
        acc = acc.reshape(BHO, 2, W, Cout)
        rs_ref[...] = acc[:, 0] + acc[:, 1]                # (BHO, W, Cout)
        even = rs_ref[:, pl.ds(0, W // 2, 2), :]
        odd = rs_ref[:, pl.ds(1, W // 2, 2), :]
        o_ref[0] = 0.25 * (even + odd)                     # (BHO, W//2, Cout)

    return kernel


def conv3x3_lrelu_pool(x_nhwc, w_taps, b):
    N, H, W, Cin = x_nhwc.shape
    Cout = w_taps.shape[-1]
    Ho, Wo = H // 2, W // 2
    BHO = min(32, Ho)
    n_rb = Ho // BHO
    kernel = _make_conv3x3_pool_kernel(BHO, H, W, Cin, Cout, n_rb)
    return pl.pallas_call(
        kernel,
        out_shape=jax.ShapeDtypeStruct((N, Ho, Wo, Cout), jnp.float32),
        grid=(N, n_rb),
        in_specs=[
            pl.BlockSpec((1, H, W, Cin), lambda n, r: (n, 0, 0, 0)),
            pl.BlockSpec((9, Cin, Cout), lambda n, r: (0, 0, 0)),
            pl.BlockSpec((1, Cout), lambda n, r: (0, 0)),
        ],
        out_specs=pl.BlockSpec((1, BHO, Wo, Cout), lambda n, r: (n, r, 0, 0)),
        scratch_shapes=[
            pltpu.VMEM((2 * BHO + 2, W + 2, Cin), jnp.float32),
            pltpu.VMEM((BHO, W, Cout), jnp.float32),
        ],
        compiler_params=pltpu.CompilerParams(
            dimension_semantics=("parallel", "arbitrary")),
    )(x_nhwc, w_taps, b.reshape(1, Cout))


# ---------------------------------------------------------------------------
# Fused 2x2 average pool + 1x1 conv (the smooth_input skip branch:
# from_gray(downscale(x))).  Grid over batch.
# ---------------------------------------------------------------------------
def _make_pool_conv1x1_kernel(H, W, Cin, Cout):
    Ho, Wo = H // 2, W // 2

    def kernel(x_ref, w_ref, b_ref, o_ref, rs_ref):
        x = x_ref[0].reshape(Ho, 2, W, Cin)
        rs_ref[...] = x[:, 0] + x[:, 1]                    # (Ho, W, Cin)
        even = rs_ref[:, pl.ds(0, Wo, 2), :]
        odd = rs_ref[:, pl.ds(1, Wo, 2), :]
        pooled = 0.25 * (even + odd)                       # (Ho, Wo, Cin)
        flat = pooled.reshape(Ho * Wo, Cin)
        out = (jnp.dot(flat, w_ref[...], preferred_element_type=jnp.float32)
               + b_ref[...])
        o_ref[0] = out.reshape(Ho, Wo, Cout)

    return kernel


def pool_conv1x1(x_nhwc, w, b):
    N, H, W, Cin = x_nhwc.shape
    Cout = w.shape[1]
    kernel = _make_pool_conv1x1_kernel(H, W, Cin, Cout)
    return pl.pallas_call(
        kernel,
        out_shape=jax.ShapeDtypeStruct((N, H // 2, W // 2, Cout), jnp.float32),
        grid=(N,),
        in_specs=[
            pl.BlockSpec((1, H, W, Cin), lambda n: (n, 0, 0, 0)),
            pl.BlockSpec((Cin, Cout), lambda n: (0, 0)),
            pl.BlockSpec((1, Cout), lambda n: (0, 0)),
        ],
        out_specs=pl.BlockSpec((1, H // 2, W // 2, Cout), lambda n: (n, 0, 0, 0)),
        scratch_shapes=[pltpu.VMEM((H // 2, W, Cin), jnp.float32)],
        compiler_params=pltpu.CompilerParams(dimension_semantics=("parallel",)),
    )(x_nhwc, w, b.reshape(1, Cout))


# ---------------------------------------------------------------------------
# Head for step==0: linear(8192 -> 1) + sigmoid with the weight pre-permuted
# to NHWC flatten order (no runtime transpose / no 8192-wide reshape).
# ---------------------------------------------------------------------------
def _head_kernel(x_ref, wlin_ref, blin_ref, o_ref):
    prod = x_ref[...] * wlin_ref[...]                      # (N,4,4,512)*(1,4,4,512)
    z = jnp.sum(prod, axis=(1, 2))                         # (N, 512)
    z = jnp.sum(z, axis=1, keepdims=True)                  # (N, 1)
    o_ref[...] = jax.nn.sigmoid(z + blin_ref[...])


def head(out4, wlin_nhwc, blin):
    N = out4.shape[0]
    return pl.pallas_call(
        _head_kernel,
        out_shape=jax.ShapeDtypeStruct((N, 1), jnp.float32),
        in_specs=[pl.BlockSpec(memory_space=VMEM)] * 3,
        out_specs=pl.BlockSpec(memory_space=VMEM),
    )(out4, wlin_nhwc, blin.reshape(1, 1))


# ---------------------------------------------------------------------------
# Fused 8x8 tail: minibatch stddev -> progression_8 conv (the 257-channel
# input is handled as a 256-channel conv plus a border-masked matmul for the
# constant stddev channel, keeping the MXU K dim at 256) -> LeakyReLU -> 2x2
# pool -> alpha blend with from_gray_4 skip -> linear + sigmoid.
# ---------------------------------------------------------------------------
def _make_tail_kernel(N):
    H, W, Cin, Cout = 8, 8, 256, 512
    M = N * H * W

    def kernel(x_ref, wm_ref, ws_ref, b_ref, skip_ref, alpha_ref,
               wlin_ref, blin_ref, o_ref, strip_ref, rs_ref):
        x = x_ref[...]                                     # (N, 8, 8, 256)

        # minibatch stddev: mean over (C,H,W) of sqrt(var over batch + 1e-8)
        mu = jnp.mean(x, axis=0, keepdims=True)
        var = jnp.mean((x - mu) ** 2, axis=0)
        ms = jnp.mean(jnp.sqrt(var + 1e-8))                # scalar

        # zero-padded activation (channels 0..255 only)
        strip_ref[...] = jnp.zeros((N, H + 2, W + 2, Cin), jnp.float32)
        strip_ref[:, 1:H + 1, 1:W + 1, :] = x

        wm = wm_ref[...]                                   # (9, 256, 512)
        acc = jnp.zeros((M, Cout), jnp.float32) + b_ref[...]
        for dy in range(3):
            for dx in range(3):
                patch = strip_ref[:, dy:dy + H, dx:dx + W, :].reshape(M, Cin)
                acc = acc + jnp.dot(patch, wm[3 * dy + dx],
                                    preferred_element_type=jnp.float32)

        # stddev channel (channel 256): constant ms over the image, zero in the
        # padding ring -> per-pixel sum of the valid taps of w_taps[:, 256, :].
        ridx = lax.broadcasted_iota(jnp.int32, (M, 9), 0)
        tap = lax.broadcasted_iota(jnp.int32, (M, 9), 1)
        hh = (ridx // W) % H
        ww = ridx % W
        kdy = tap // 3
        kdx = tap % 3
        valid = ((hh + kdy >= 1) & (hh + kdy <= H)
                 & (ww + kdx >= 1) & (ww + kdx <= W)).astype(jnp.float32)
        acc = acc + jnp.dot(valid, ws_ref[...] * ms,
                            preferred_element_type=jnp.float32)

        acc = jnp.where(acc >= 0.0, acc, LRELU_SLOPE * acc)

        # 2x2 average pool: 8x8 -> 4x4
        acc = acc.reshape(N, 4, 2, W, Cout)
        rs_ref[...] = acc[:, :, 0] + acc[:, :, 1]          # (N, 4, 8, 512)
        even = rs_ref[:, :, pl.ds(0, 4, 2), :]
        odd = rs_ref[:, :, pl.ds(1, 4, 2), :]
        out4 = 0.25 * (even + odd)                         # (N, 4, 4, 512)

        # progressive-growing blend with the from_gray_4 skip branch (step==1)
        alpha = alpha_ref[0, 0]
        out4 = (1.0 - alpha) * skip_ref[...] + alpha * out4

        # linear(8192 -> 1) + sigmoid (weight pre-permuted to NHWC order)
        prod = out4 * wlin_ref[...]                        # (N,4,4,512)*(1,4,4,512)
        z = jnp.sum(prod, axis=(1, 2))                     # (N, 512)
        z = jnp.sum(z, axis=1, keepdims=True)              # (N, 1)
        o_ref[...] = jax.nn.sigmoid(z + blin_ref[...])

    return kernel


def tail(out8, w_main, w_std, b, skip4, alpha, wlin_nhwc, blin):
    N = out8.shape[0]
    kernel = _make_tail_kernel(N)
    alpha_arr = jnp.full((1, 1), alpha, jnp.float32)
    return pl.pallas_call(
        kernel,
        out_shape=jax.ShapeDtypeStruct((N, 1), jnp.float32),
        in_specs=[pl.BlockSpec(memory_space=VMEM)] * 5
        + [pl.BlockSpec(memory_space=SMEM)]
        + [pl.BlockSpec(memory_space=VMEM)] * 2,
        out_specs=pl.BlockSpec(memory_space=VMEM),
        scratch_shapes=[
            pltpu.VMEM((N, 10, 10, 256), jnp.float32),
            pltpu.VMEM((N, 4, 8, 512), jnp.float32),
        ],
    )(out8, w_main, w_std, b.reshape(1, -1), skip4, alpha_arr, wlin_nhwc,
      blin.reshape(1, 1))


# ---------------------------------------------------------------------------
# Parameters (deterministic synthetic init, mirroring the module's __init__).
# ---------------------------------------------------------------------------
def init_params(key, in_ch):
    params = {"from_gray": [], "prog": [None]}
    keys = jax.random.split(key, 40)
    ki = 0
    for cout in FROM_GRAY_OUT:
        w = jax.random.normal(keys[ki], (in_ch, cout), jnp.float32) * 0.1
        ki += 1
        b = jax.random.normal(keys[ki], (cout,), jnp.float32) * 0.01
        ki += 1
        params["from_gray"].append((w, b))
    for i in range(1, 7):
        cin, cout = PROG_IN[i], PROG_OUT[i]
        # EqualConv2d: weight ~ N(0,1), bias = 0, runtime scale sqrt(2 / fan_in).
        w_oihw = jax.random.normal(keys[ki], (cout, cin, 3, 3), jnp.float32)
        ki += 1
        scale = sqrt(2.0 / (cin * 3 * 3))
        w_taps = jnp.transpose(w_oihw * scale, (2, 3, 1, 0)).reshape(9, cin, cout)
        b = jnp.zeros((cout,), jnp.float32)
        if i == 1:
            # split off the stddev channel (input channel 256) of progression_8
            params["prog"].append((w_taps[:, :256, :], w_taps[:, 256, :], b))
        else:
            params["prog"].append((w_taps, b))
    wlin_t = jax.random.normal(keys[ki], (8192, 1), jnp.float32) / sqrt(8192.0)
    ki += 1
    blin = jnp.zeros((1,), jnp.float32)
    # pre-permute the linear weight from torch's NCHW flatten order (c*16+h*4+w)
    # to NHWC flatten order so the kernels never transpose the 4x4x512 feature.
    wlin_nhwc = jnp.transpose(wlin_t.reshape(512, 4, 4), (1, 2, 0))[None]  # (1,4,4,512)
    params["linear"] = (wlin_t, blin, wlin_nhwc)
    return params


# ---------------------------------------------------------------------------
# Forward pass (mirrors Discriminator.forward for all steps / alpha).
# ---------------------------------------------------------------------------
def discriminator_forward(x_nchw, params, step=0, alpha=-1.0):
    step = min(step, 6)
    x = jnp.transpose(x_nchw, (0, 2, 3, 1)).astype(jnp.float32)  # NCHW -> NHWC
    N = x.shape[0]
    fg = params["from_gray"]
    prog = params["prog"]
    _, blin, wlin_nhwc = params["linear"]
    w_main, w_std, b1 = prog[1]

    if step == 0:
        return head(conv1x1(x, *fg[0]), wlin_nhwc, blin)

    out = conv1x1(x, *fg[step])
    for i in range(step, 1, -1):
        out = conv3x3_lrelu_pool(out, *prog[i])               # progress()
        if i == step and 0.0 <= alpha < 1.0:                  # smooth_input()
            skip = pool_conv1x1(x, *fg[i - 1])
            out = (1.0 - alpha) * skip + alpha * out

    if step == 1 and 0.0 <= alpha < 1.0:
        skip4 = pool_conv1x1(x, *fg[0])
        a_eff = alpha
    else:
        skip4 = jnp.zeros((N, 4, 4, 512), jnp.float32)
        a_eff = 1.0
    return tail(out, w_main, w_std, b1, skip4, a_eff, wlin_nhwc, blin)


# ---------------------------------------------------------------------------
# Pure-JAX NCHW reference (validation only).
# ---------------------------------------------------------------------------
def reference_forward(x, params, step=0, alpha=-1.0):
    step = min(step, 6)
    N = x.shape[0]

    def conv2d(inp, w, b, pad):
        y = lax.conv_general_dilated(
            inp, w, (1, 1), [(pad, pad), (pad, pad)],
            dimension_numbers=("NCHW", "OIHW", "NCHW"))
        return y + b[None, :, None, None]

    def pool(inp):
        s = lax.reduce_window(inp, 0.0, lax.add, (1, 1, 2, 2), (1, 1, 2, 2), "VALID")
        return s / 4.0

    def fg_conv(inp, idx):
        w, b = params["from_gray"][idx]
        return conv2d(inp, w.T[:, :, None, None], b, 0)

    def prog_taps(idx):
        if idx == 1:
            wm, ws, b = params["prog"][1]
            return jnp.concatenate([wm, ws[:, None, :]], axis=1), b
        wt, b = params["prog"][idx]
        return wt, b

    def prog_conv(inp, idx):
        wt, b = prog_taps(idx)
        cin, cout = wt.shape[1], wt.shape[2]
        wf = jnp.transpose(wt.reshape(3, 3, cin, cout), (3, 2, 0, 1))
        y = conv2d(inp, wf, b, 1)
        y = jnp.where(y >= 0, y, 0.2 * y)
        return pool(y)

    def head_ref(out4):
        wlin_t, blin, _ = params["linear"]
        return jax.nn.sigmoid(out4.reshape(N, -1) @ wlin_t + blin[None, :])

    if step == 0:
        return head_ref(fg_conv(x, 0))
    out = fg_conv(x, step)
    for i in range(step, 1, -1):
        out = prog_conv(out, i)
        if i == step and 0.0 <= alpha < 1.0:
            out = (1.0 - alpha) * fg_conv(pool(x), i - 1) + alpha * out
    ms = jnp.mean(jnp.sqrt(jnp.var(out, axis=0) + 1e-8))
    out = jnp.concatenate([out, jnp.full((N, 1, 8, 8), ms, jnp.float32)], axis=1)
    out4 = prog_conv(out, 1)
    if step == 1 and 0.0 <= alpha < 1.0:
        out4 = (1.0 - alpha) * fg_conv(pool(x), 0) + alpha * out4
    return head_ref(out4)


if __name__ == "__main__":
    key = jax.random.PRNGKey(0)
    kp, kx = jax.random.split(key)
    in_ch = 4
    params = init_params(kp, in_ch)

    # (step, alpha) configs: primary config is step=2 (16x16 input) with the
    # smooth_input blend; also exercise steps 0, 1 and 3.
    configs = [(2, 0.5), (1, 0.3), (3, -1.0), (0, -1.0)]
    for step, alpha in configs:
        res = 4 * (2 ** step)
        kx, sub = jax.random.split(kx)
        x = jax.random.normal(sub, (2, in_ch, res, res), jnp.float32)
        out = jax.block_until_ready(
            discriminator_forward(x, params, step=step, alpha=alpha))
        assert out.shape == (2, 1)
        ref = reference_forward(x, params, step=step, alpha=alpha)
        # bf16 MXU operands (f32 accumulation) in the 3x3 convs -> loose-ish tol.
        np.testing.assert_allclose(np.asarray(out), np.asarray(ref),
                                   rtol=2e-2, atol=2e-2)

    print("KERNEL_OK")
</pallas_src>

<mosaic_0001>
module attributes {stable_mosaic.version = 11 : i64} {
  func.func @_conv1x1_kernel(%arg0: i32, %arg1: memref<512x4xf32, #tpu.memory_space<vmem>>, %arg2: memref<4x128xf32, #tpu.memory_space<vmem>>, %arg3: memref<1x128xf32, #tpu.memory_space<vmem>>, %arg4: memref<512x128xf32, #tpu.memory_space<vmem>>) attributes {dimension_semantics = [#tpu.dimension_semantics<parallel>], iteration_bounds = array<i64: 1>, scalar_prefetch = 0 : i64, scratch_operands = 0 : i64, tpu.core_type = #tpu.core_type<tc>, window_params = [{transform_indices = @transform_0, window_bounds = array<i64: 512, 4>}, {pipeline_mode = #tpu.pipeline_mode<synchronous>, transform_indices = @transform_1, window_bounds = array<i64: 4, 128>}, {pipeline_mode = #tpu.pipeline_mode<synchronous>, transform_indices = @transform_2, window_bounds = array<i64: 1, 128>}, {transform_indices = @transform_3, window_bounds = array<i64: 512, 128>}]} {
    %c0 = arith.constant 0 : index
    %c0_0 = arith.constant 0 : index
    %0 = vector.load %arg1[%c0, %c0_0] : memref<512x4xf32, #tpu.memory_space<vmem>>, vector<512x4xf32>
    %c0_1 = arith.constant 0 : index
    %c0_2 = arith.constant 0 : index
    %1 = vector.load %arg2[%c0_1, %c0_2] : memref<4x128xf32, #tpu.memory_space<vmem>>, vector<4x128xf32>
    %cst = arith.constant dense<0.000000e+00> : vector<512x128xf32>
    %2 = tpu.matmul %0, %1, %cst {dimension_numbers = #tpu.dot_dimension_numbers<[1], [0], [0], [1], [0, 0, 1, 1], [], []>} : vector<512x4xf32>, vector<4x128xf32>, vector<512x128xf32> -> vector<512x128xf32>
    %c0_3 = arith.constant 0 : index
    %c0_4 = arith.constant 0 : index
    %3 = vector.load %arg3[%c0_3, %c0_4] : memref<1x128xf32, #tpu.memory_space<vmem>>, vector<1x128xf32>
    %4 = vector.broadcast %3 : vector<1x128xf32> to vector<512x128xf32>
    %5 = arith.addf %2, %4 : vector<512x128xf32>
    %c0_5 = arith.constant 0 : index
    %c0_6 = arith.constant 0 : index
    %6 = vector.load %arg4[%c0_5, %c0_6] : memref<512x128xf32, #tpu.memory_space<vmem>>, vector<512x128xf32>
    tpu.vector_store %arg4[%c0_5, %c0_6], %5 {strides = array<i32>} : memref<512x128xf32, #tpu.memory_space<vmem>>, vector<512x128xf32>,
    return
  }
  func.func @transform_0(%arg0: i32) -> (i32, i32) {
    %c0_i32 = arith.constant 0 : i32
    %c0_i32_0 = arith.constant 0 : i32
    return %arg0, %c0_i32 : i32, i32
  }
  func.func @transform_1(%arg0: i32) -> (i32, i32) {
    %c0_i32 = arith.constant 0 : i32
    %c0_i32_0 = arith.constant 0 : i32
    %c0_i32_1 = arith.constant 0 : i32
    return %c0_i32, %c0_i32_0 : i32, i32
  }
  func.func @transform_2(%arg0: i32) -> (i32, i32) {
    %c0_i32 = arith.constant 0 : i32
    %c0_i32_0 = arith.constant 0 : i32
    %c0_i32_1 = arith.constant 0 : i32
    return %c0_i32, %c0_i32_0 : i32, i32
  }
  func.func @transform_3(%arg0: i32) -> (i32, i32) {
    %c0_i32 = arith.constant 0 : i32
    %c0_i32_0 = arith.constant 0 : i32
    return %arg0, %c0_i32 : i32, i32
  }
}

</mosaic_0001>

<llo_original>
// kernel: tpu_custom_call.1
$region0: #{tpu_custom_call.1}
  #allocation0 [shape = 'u32[]', space=smem, size = 0x4, offset = 0x4, fixed_abs, tag = 'smem constant byte address 0x4 - core index']
  #allocation1 [shape = 'u32[72,128]{1,0:T(1,128)}', space=vmem, size = 0x9000, scoped, tag = 'internal scratch']
  %s0 = inlined_call_operand.vmem [shape: f32[512,4], index: 0, kind: input, shape index: {}]
  %s1 = inlined_call_operand.vmem [shape: f32[4,128], index: 1, kind: input, shape index: {}]
  %s2 = inlined_call_operand.vmem [shape: f32[1,128], index: 2, kind: input, shape index: {}]
  %s3 = inlined_call_operand.hbm [shape: f32[512,128], index: 3, kind: output, shape index: {}]
  %s4 = sld [smem:[#allocation0]]
  $region22: #{tpu_custom_call.1} parent=0
    _
  %s6 = ssub.s32 1, %s4
  %s7 = scalar_select 0, %s6, %s4
  $region1: #{tpu_custom_call.1} parent=0
    #allocation2 [shape = 'u8[262144]{0}', space=vmem, size = 0x40000, scoped, tag = 'output window, operand 0, single buffered']
    #allocation3 [shape = 's32[1]{0}', space=sflag, size = 0x4, scoped, tag = 'scoped memory for tpu_custom_call.1']
    %8 = vsyncpa [#allocation3], 0
    // Predicated region
    $region2: #{tpu_custom_call.1} parent=1 // pred_check
      _
    $region3: #{tpu_custom_call.1} parent=1 // pred_check_branch
      %10 = sbr.rel (0) target = $region5
    $region4: #{tpu_custom_call.1} parent=1 // pred_region
      _
    $region5: #{tpu_custom_call.1} parent=1 // pred_fallthru
      _
    // Predicated region
    $region6: #{tpu_custom_call.1} parent=1 // pred_check
      _
    $region7: #{tpu_custom_call.1} parent=1 // pred_check_branch
      %12 = sbr.rel (0) target = $region9
    $region8: #{tpu_custom_call.1} parent=1 // pred_region
      _
    $region9: #{tpu_custom_call.1} parent=1 // pred_fallthru
      _
    // Predicated region
    $region10: #{tpu_custom_call.1} parent=1 // pred_check
      _
    $region11: #{tpu_custom_call.1} parent=1 // pred_check_branch
      %14 = sbr.rel (0) target = $region13
    $region12: #{tpu_custom_call.1} parent=1 // pred_region
      _
    $region13: #{tpu_custom_call.1} parent=1 // pred_fallthru
      _
    %v15 = vld [vmem:[%s0] sm:$0xff]
    %v16 = vld [vmem:[%s0 + $0x8] sm:$0xff]
    %v17 = vld [vmem:[%s0 + $0x10] sm:$0xff]
    %v18 = vld [vmem:[%s0 + $0x18] sm:$0xff]
    %v19 = vld [vmem:[%s0 + $0x20] sm:$0xff]
    %v20 = vld [vmem:[%s0 + $0x28] sm:$0xff]
    %v21 = vld [vmem:[%s0 + $0x30] sm:$0xff]
    %v22 = vld [vmem:[%s0 + $0x38] sm:$0xff]
    %v23 = vld [vmem:[%s0 + $0x40] sm:$0xff]
    %v24 = vld [vmem:[%s0 + $0x48] sm:$0xff]
    %v25 = vld [vmem:[%s0 + $0x50] sm:$0xff]
    %v26 = vld [vmem:[%s0 + $0x58] sm:$0xff]
    %v27 = vld [vmem:[%s0 + $0x60] sm:$0xff]
    %v28 = vld [vmem:[%s0 + $0x68] sm:$0xff]
    %v29 = vld [vmem:[%s0 + $0x70] sm:$0xff]
    %v30 = vld [vmem:[%s0 + $0x78] sm:$0xff]
    %v31 = vld [vmem:[%s0 + $0x80] sm:$0xff]
    %v32 = vld [vmem:[%s0 + $0x88] sm:$0xff]
    %v33 = vld [vmem:[%s0 + $0x90] sm:$0xff]
    %v34 = vld [vmem:[%s0 + $0x98] sm:$0xff]
    %v35 = vld [vmem:[%s0 + $0xa0] sm:$0xff]
    %v36 = vld [vmem:[%s0 + $0xa8] sm:$0xff]
    %v37 = vld [vmem:[%s0 + $0xb0] sm:$0xff]
    %v38 = vld [vmem:[%s0 + $0xb8] sm:$0xff]
    %v39 = vld [vmem:[%s0 + $0xc0] sm:$0xff]
    %v40 = vld [vmem:[%s0 + $0xc8] sm:$0xff]
    %v41 = vld [vmem:[%s0 + $0xd0] sm:$0xff]
    %v42 = vld [vmem:[%s0 + $0xd8] sm:$0xff]
    %v43 = vld [vmem:[%s0 + $0xe0] sm:$0xff]
    %v44 = vld [vmem:[%s0 + $0xe8] sm:$0xff]
    %v45 = vld [vmem:[%s0 + $0xf0] sm:$0xff]
    %v46 = vld [vmem:[%s0 + $0xf8] sm:$0xff]
    %v47 = vld [vmem:[%s0 + $0x100] sm:$0xff]
    %v48 = vld [vmem:[%s0 + $0x108] sm:$0xff]
    %v49 = vld [vmem:[%s0 + $0x110] sm:$0xff]
    %v50 = vld [vmem:[%s0 + $0x118] sm:$0xff]
    %v51 = vld [vmem:[%s0 + $0x120] sm:$0xff]
    %v52 = vld [vmem:[%s0 + $0x128] sm:$0xff]
    %v53 = vld [vmem:[%s0 + $0x130] sm:$0xff]
    %v54 = vld [vmem:[%s0 + $0x138] sm:$0xff]
    %v55 = vld [vmem:[%s0 + $0x140] sm:$0xff]
    %v56 = vld [vmem:[%s0 + $0x148] sm:$0xff]
    %v57 = vld [vmem:[%s0 + $0x150] sm:$0xff]
    %v58 = vld [vmem:[%s0 + $0x158] sm:$0xff]
    %v59 = vld [vmem:[%s0 + $0x160] sm:$0xff]
    %v60 = vld [vmem:[%s0 + $0x168] sm:$0xff]
    %v61 = vld [vmem:[%s0 + $0x170] sm:$0xff]
    %v62 = vld [vmem:[%s0 + $0x178] sm:$0xff]
    %v63 = vld [vmem:[%s0 + $0x180] sm:$0xff]
    %v64 = vld [vmem:[%s0 + $0x188] sm:$0xff]
    %v65 = vld [vmem:[%s0 + $0x190] sm:$0xff]
    %v66 = vld [vmem:[%s0 + $0x198] sm:$0xff]
    %v67 = vld [vmem:[%s0 + $0x1a0] sm:$0xff]
    %v68 = vld [vmem:[%s0 + $0x1a8] sm:$0xff]
    %v69 = vld [vmem:[%s0 + $0x1b0] sm:$0xff]
    %v70 = vld [vmem:[%s0 + $0x1b8] sm:$0xff]
    %v71 = vld [vmem:[%s0 + $0x1c0] sm:$0xff]
    %v72 = vld [vmem:[%s0 + $0x1c8] sm:$0xff]
    %v73 = vld [vmem:[%s0 + $0x1d0] sm:$0xff]
    %v74 = vld [vmem:[%s0 + $0x1d8] sm:$0xff]
    %v75 = vld [vmem:[%s0 + $0x1e0] sm:$0xff]
    %v76 = vld [vmem:[%s0 + $0x1e8] sm:$0xff]
    %v77 = vld [vmem:[%s0 + $0x1f0] sm:$0xff]
    %v78 = vld [vmem:[%s0 + $0x1f8] sm:$0xff]
    %v79 = vld [vmem:[%s1] sm:$0xf]
    %v80 = vld [vmem:[%s2] sm:$0x1]
    %v82 = vperm.slane %v80, 0
    %vm84 = vcmask 31744
    %v86 = vsel %vm84, %v15, 0
    %v89 = vsel %vm84, %v16, 0
    %v92 = vsel %vm84, %v17, 0
    %v95 = vsel %vm84, %v18, 0
    %v98 = vsel %vm84, %v19, 0
    %v101 = vsel %vm84, %v20, 0
    %v104 = vsel %vm84, %v21, 0
    %v107 = vsel %vm84, %v22, 0
    %v110 = vsel %vm84, %v23, 0
    %v113 = vsel %vm84, %v24, 0
    %v116 = vsel %vm84, %v25, 0
    %v119 = vsel %vm84, %v26, 0
    %v122 = vsel %vm84, %v27, 0
    %v125 = vsel %vm84, %v28, 0
    %v128 = vsel %vm84, %v29, 0
    %v131 = vsel %vm84, %v30, 0
    %v134 = vsel %vm84, %v31, 0
    %v137 = vsel %vm84, %v32, 0
    %v140 = vsel %vm84, %v33, 0
    %v143 = vsel %vm84, %v34, 0
    %v146 = vsel %vm84, %v35, 0
    %v149 = vsel %vm84, %v36, 0
    %v152 = vsel %vm84, %v37, 0
    %v155 = vsel %vm84, %v38, 0
    %v158 = vsel %vm84, %v39, 0
    %v161 = vsel %vm84, %v40, 0
    %v164 = vsel %vm84, %v41, 0
    %v167 = vsel %vm84, %v42, 0
    %v170 = vsel %vm84, %v43, 0
    %v173 = vsel %vm84, %v44, 0
    %v176 = vsel %vm84, %v45, 0
    %v179 = vsel %vm84, %v46, 0
    %v182 = vsel %vm84, %v47, 0
    %v185 = vsel %vm84, %v48, 0
    %v188 = vsel %vm84, %v49, 0
    %v191 = vsel %vm84, %v50, 0
    %v194 = vsel %vm84, %v51, 0
    %v197 = vsel %vm84, %v52, 0
    %v200 = vsel %vm84, %v53, 0
    %v203 = vsel %vm84, %v54, 0
    %v206 = vsel %vm84, %v55, 0
    %v209 = vsel %vm84, %v56, 0
    %v212 = vsel %vm84, %v57, 0
    %v215 = vsel %vm84, %v58, 0
    %v218 = vsel %vm84, %v59, 0
    %v221 = vsel %vm84, %v60, 0
    %v224 = vsel %vm84, %v61, 0
    %v227 = vsel %vm84, %v62, 0
    %v230 = vsel %vm84, %v63, 0
    %v233 = vsel %vm84, %v64, 0
    %v236 = vsel %vm84, %v65, 0
    %v239 = vsel %vm84, %v66, 0
    %v242 = vsel %vm84, %v67, 0
    %v245 = vsel %vm84, %v68, 0
    %v248 = vsel %vm84, %v69, 0
    %v251 = vsel %vm84, %v70, 0
    %v254 = vsel %vm84, %v71, 0
    %v257 = vsel %vm84, %v72, 0
    %v260 = vsel %vm84, %v73, 0
    %v263 = vsel %vm84, %v74, 0
    %v266 = vsel %vm84, %v75, 0
    %v269 = vsel %vm84, %v76, 0
    %v272 = vsel %vm84, %v77, 0
    %v275 = vsel %vm84, %v78, 0
    %vm277 = vcmask 1043456
    %v279 = vsel %vm277, %v79, 0
    %281 = vmatpush.msra.mxu0 0.0
    %282 = vmatpush.msra.mxu0 0.0
    %283 = vmatpush.msra.mxu0 0.0
    %284 = vmatpush.msra.mxu0 0.0
    %285 = vmatpush.msra.mxu0 0.0
    %286 = vmatpush.msra.mxu0 0.0
    %287 = vmatpush.msra.mxu0 0.0
    %288 = vmatpush.msra.mxu0 0.0
    %289 = vmatpush.msra.mxu0 0.0
    %290 = vmatpush.msra.mxu0 0.0
    %291 = vmatpush.msra.mxu0 0.0
    %292 = vmatpush.msra.mxu0 0.0
    %293 = vmatpush.msra.mxu0 0.0
    %294 = vmatpush.msra.mxu0 0.0
    %295 = vmatpush.msra.mxu0 0.0
    %296 = vmatpush.msra.mxu0 %v279
    %297 = vmatmul.f32.gmra.mxu0 %v86
    %v298 = vpop.f32.mrf.mxu0
    %v299 = vadd.f32 %v82, %v298
    %300 = vmatmul.f32.gmra.mxu0 %v89
    %v301 = vpop.f32.mrf.mxu0
    %v302 = vadd.f32 %v82, %v301
    %303 = vmatmul.f32.gmra.mxu0 %v92
    %v304 = vpop.f32.mrf.mxu0
    %v305 = vadd.f32 %v82, %v304
    %306 = vmatmul.f32.gmra.mxu0 %v95
    %v307 = vpop.f32.mrf.mxu0
    %v308 = vadd.f32 %v82, %v307
    %309 = vmatmul.f32.gmra.mxu0 %v98
    %v310 = vpop.f32.mrf.mxu0
    %v311 = vadd.f32 %v82, %v310
    %312 = vmatmul.f32.gmra.mxu0 %v101
    %v313 = vpop.f32.mrf.mxu0
    %v314 = vadd.f32 %v82, %v313
    %315 = vmatmul.f32.gmra.mxu0 %v104
    %v316 = vpop.f32.mrf.mxu0
    %v317 = vadd.f32 %v82, %v316
    %318 = vmatmul.f32.gmra.mxu0 %v107
    %v319 = vpop.f32.mrf.mxu0
    %v320 = vadd.f32 %v82, %v319
    %321 = vmatmul.f32.gmra.mxu0 %v110
    %v322 = vpop.f32.mrf.mxu0
    %v323 = vadd.f32 %v82, %v322
    %324 = vmatmul.f32.gmra.mxu0 %v113
    %v325 = vpop.f32.mrf.mxu0
    %v326 = vadd.f32 %v82, %v325
    %327 = vmatmul.f32.gmra.mxu0 %v116
    %v328 = vpop.f32.mrf.mxu0
    %v329 = vadd.f32 %v82, %v328
    %330 = vmatmul.f32.gmra.mxu0 %v119
    %v331 = vpop.f32.mrf.mxu0
    %v332 = vadd.f32 %v82, %v331
    %333 = vmatmul.f32.gmra.mxu0 %v122
    %v334 = vpop.f32.mrf.mxu0
    %v335 = vadd.f32 %v82, %v334
    %336 = vmatmul.f32.gmra.mxu0 %v125
    %v337 = vpop.f32.mrf.mxu0
    %v338 = vadd.f32 %v82, %v337
    %339 = vmatmul.f32.gmra.mxu0 %v128
    %v340 = vpop.f32.mrf.mxu0
    %v341 = vadd.f32 %v82, %v340
    %342 = vmatmul.f32.gmra.mxu0 %v131
    %v343 = vpop.f32.mrf.mxu0
    %v344 = vadd.f32 %v82, %v343
    %345 = vmatmul.f32.gmra.mxu0 %v134
    %v346 = vpop.f32.mrf.mxu0
    %v347 = vadd.f32 %v82, %v346
    %348 = vmatmul.f32.gmra.mxu0 %v137
    %v349 = vpop.f32.mrf.mxu0
    %v350 = vadd.f32 %v82, %v349
    %351 = vmatmul.f32.gmra.mxu0 %v140
    %v352 = vpop.f32.mrf.mxu0
    %v353 = vadd.f32 %v82, %v352
    %354 = vmatmul.f32.gmra.mxu0 %v143
    %v355 = vpop.f32.mrf.mxu0
    %v356 = vadd.f32 %v82, %v355
    %357 = vmatmul.f32.gmra.mxu0 %v146
    %v358 = vpop.f32.mrf.mxu0
    %v359 = vadd.f32 %v82, %v358
    %360 = vmatmul.f32.gmra.mxu0 %v149
    %v361 = vpop.f32.mrf.mxu0
    %v362 = vadd.f32 %v82, %v361
    %363 = vmatmul.f32.gmra.mxu0 %v152
    %v364 = vpop.f32.mrf.mxu0
    %v365 = vadd.f32 %v82, %v364
    %366 = vmatmul.f32.gmra.mxu0 %v155
    %v367 = vpop.f32.mrf.mxu0
    %v368 = vadd.f32 %v82, %v367
    %369 = vmatmul.f32.gmra.mxu0 %v158
    %v370 = vpop.f32.mrf.mxu0
    %v371 = vadd.f32 %v82, %v370
    %372 = vmatmul.f32.gmra.mxu0 %v161
    %v373 = vpop.f32.mrf.mxu0
    %v374 = vadd.f32 %v82, %v373
    %375 = vmatmul.f32.gmra.mxu0 %v164
    %v376 = vpop.f32.mrf.mxu0
    %v377 = vadd.f32 %v82, %v376
    %378 = vmatmul.f32.gmra.mxu0 %v167
    %v379 = vpop.f32.mrf.mxu0
    %v380 = vadd.f32 %v82, %v379
    %381 = vmatmul.f32.gmra.mxu0 %v170
    %v382 = vpop.f32.mrf.mxu0
    %v383 = vadd.f32 %v82, %v382
    %384 = vmatmul.f32.gmra.mxu0 %v173
    %v385 = vpop.f32.mrf.mxu0
    %v386 = vadd.f32 %v82, %v385
    %387 = vmatmul.f32.gmra.mxu0 %v176
    %v388 = vpop.f32.mrf.mxu0
    %v389 = vadd.f32 %v82, %v388
    %390 = vmatmul.f32.gmra.mxu0 %v179
    %v391 = vpop.f32.mrf.mxu0
    %v392 = vadd.f32 %v82, %v391
    %393 = vmatmul.f32.gmra.mxu0 %v182
    %v394 = vpop.f32.mrf.mxu0
    %v395 = vadd.f32 %v82, %v394
    %396 = vmatmul.f32.gmra.mxu0 %v185
    %v397 = vpop.f32.mrf.mxu0
    %v398 = vadd.f32 %v82, %v397
    %399 = vmatmul.f32.gmra.mxu0 %v188
    %v400 = vpop.f32.mrf.mxu0
    %v401 = vadd.f32 %v82, %v400
    %402 = vmatmul.f32.gmra.mxu0 %v191
    %v403 = vpop.f32.mrf.mxu0
    %v404 = vadd.f32 %v82, %v403
    %405 = vmatmul.f32.gmra.mxu0 %v194
    %v406 = vpop.f32.mrf.mxu0
    %v407 = vadd.f32 %v82, %v406
    %408 = vmatmul.f32.gmra.mxu0 %v197
    %v409 = vpop.f32.mrf.mxu0
    %v410 = vadd.f32 %v82, %v409
    %411 = vmatmul.f32.gmra.mxu0 %v200
    %v412 = vpop.f32.mrf.mxu0
    %v413 = vadd.f32 %v82, %v412
    %414 = vmatmul.f32.gmra.mxu0 %v203
    %v415 = vpop.f32.mrf.mxu0
    %v416 = vadd.f32 %v82, %v415
    %417 = vmatmul.f32.gmra.mxu0 %v206
    %v418 = vpop.f32.mrf.mxu0
    %v419 = vadd.f32 %v82, %v418
    %420 = vmatmul.f32.gmra.mxu0 %v209
    %v421 = vpop.f32.mrf.mxu0
    %v422 = vadd.f32 %v82, %v421
    %423 = vmatmul.f32.gmra.mxu0 %v212
    %v424 = vpop.f32.mrf.mxu0
    %v425 = vadd.f32 %v82, %v424
    %426 = vmatmul.f32.gmra.mxu0 %v215
    %v427 = vpop.f32.mrf.mxu0
    %v428 = vadd.f32 %v82, %v427
    %429 = vmatmul.f32.gmra.mxu0 %v218
    %v430 = vpop.f32.mrf.mxu0
    %v431 = vadd.f32 %v82, %v430
    %432 = vmatmul.f32.gmra.mxu0 %v221
    %v433 = vpop.f32.mrf.mxu0
    %v434 = vadd.f32 %v82, %v433
    %435 = vmatmul.f32.gmra.mxu0 %v224
    %v436 = vpop.f32.mrf.mxu0
    %v437 = vadd.f32 %v82, %v436
    %438 = vmatmul.f32.gmra.mxu0 %v227
    %v439 = vpop.f32.mrf.mxu0
    %v440 = vadd.f32 %v82, %v439
    %441 = vmatmul.f32.gmra.mxu0 %v230
    %v442 = vpop.f32.mrf.mxu0
    %v443 = vadd.f32 %v82, %v442
    %444 = vmatmul.f32.gmra.mxu0 %v233
    %v445 = vpop.f32.mrf.mxu0
    %v446 = vadd.f32 %v82, %v445
    %447 = vmatmul.f32.gmra.mxu0 %v236
    %v448 = vpop.f32.mrf.mxu0
    %v449 = vadd.f32 %v82, %v448
    %450 = vmatmul.f32.gmra.mxu0 %v239
    %v451 = vpop.f32.mrf.mxu0
    %v452 = vadd.f32 %v82, %v451
    %453 = vmatmul.f32.gmra.mxu0 %v242
    %v454 = vpop.f32.mrf.mxu0
    %v455 = vadd.f32 %v82, %v454
    %456 = vmatmul.f32.gmra.mxu0 %v245
    %v457 = vpop.f32.mrf.mxu0
    %v458 = vadd.f32 %v82, %v457
    %459 = vmatmul.f32.gmra.mxu0 %v248
    %v460 = vpop.f32.mrf.mxu0
    %v461 = vadd.f32 %v82, %v460
    %462 = vmatmul.f32.gmra.mxu0 %v251
    %v463 = vpop.f32.mrf.mxu0
    %v464 = vadd.f32 %v82, %v463
    %465 = vmatmul.f32.gmra.mxu0 %v254
    %v466 = vpop.f32.mrf.mxu0
    %v467 = vadd.f32 %v82, %v466
    %468 = vmatmul.f32.gmra.mxu0 %v257
    %v469 = vpop.f32.mrf.mxu0
    %v470 = vadd.f32 %v82, %v469
    %471 = vmatmul.f32.gmra.mxu0 %v260
    %v472 = vpop.f32.mrf.mxu0
    %v473 = vadd.f32 %v82, %v472
    %474 = vmatmul.f32.gmra.mxu0 %v263
    %v475 = vpop.f32.mrf.mxu0
    %v476 = vadd.f32 %v82, %v475
    %477 = vmatmul.f32.gmra.mxu0 %v266
    %v478 = vpop.f32.mrf.mxu0
    %v479 = vadd.f32 %v82, %v478
    %480 = vmatmul.f32.gmra.mxu0 %v269
    %v481 = vpop.f32.mrf.mxu0
    %v482 = vadd.f32 %v82, %v481
    %483 = vmatmul.f32.gmra.mxu0 %v272
    %v484 = vpop.f32.mrf.mxu0
    %v485 = vadd.f32 %v82, %v484
    %486 = vmatmul.f32.gmra.mxu0 %v275
    %v487 = vpop.f32.mrf.mxu0
    %v488 = vadd.f32 %v82, %v487
    %489 = vdwg.mxu0
    %490 = vst [vmem:[#allocation2] sm:$0xff] %v299
    %491 = vst [vmem:[#allocation2 + $0x8] sm:$0xff] %v302
    %492 = vst [vmem:[#allocation2 + $0x10] sm:$0xff] %v305
    %493 = vst [vmem:[#allocation2 + $0x18] sm:$0xff] %v308
    %494 = vst [vmem:[#allocation2 + $0x20] sm:$0xff] %v311
    %495 = vst [vmem:[#allocation2 + $0x28] sm:$0xff] %v314
    %496 = vst [vmem:[#allocation2 + $0x30] sm:$0xff] %v317
    %497 = vst [vmem:[#allocation2 + $0x38] sm:$0xff] %v320
    %498 = vst [vmem:[#allocation2 + $0x40] sm:$0xff] %v323
    %499 = vst [vmem:[#allocation2 + $0x48] sm:$0xff] %v326
    %500 = vst [vmem:[#allocation2 + $0x50] sm:$0xff] %v329
    %501 = vst [vmem:[#allocation2 + $0x58] sm:$0xff] %v332
    %502 = vst [vmem:[#allocation2 + $0x60] sm:$0xff] %v335
    %503 = vst [vmem:[#allocation2 + $0x68] sm:$0xff] %v338
    %504 = vst [vmem:[#allocation2 + $0x70] sm:$0xff] %v341
    %505 = vst [vmem:[#allocation2 + $0x78] sm:$0xff] %v344
    %506 = vst [vmem:[#allocation2 + $0x80] sm:$0xff] %v347
    %507 = vst [vmem:[#allocation2 + $0x88] sm:$0xff] %v350
    %508 = vst [vmem:[#allocation2 + $0x90] sm:$0xff] %v353
    %509 = vst [vmem:[#allocation2 + $0x98] sm:$0xff] %v356
    %510 = vst [vmem:[#allocation2 + $0xa0] sm:$0xff] %v359
    %511 = vst [vmem:[#allocation2 + $0xa8] sm:$0xff] %v362
    %512 = vst [vmem:[#allocation2 + $0xb0] sm:$0xff] %v365
    %513 = vst [vmem:[#allocation2 + $0xb8] sm:$0xff] %v368
    %514 = vst [vmem:[#allocation2 + $0xc0] sm:$0xff] %v371
    %515 = vst [vmem:[#allocation2 + $0xc8] sm:$0xff] %v374
    %516 = vst [vmem:[#allocation2 + $0xd0] sm:$0xff] %v377
    %517 = vst [vmem:[#allocation2 + $0xd8] sm:$0xff] %v380
    %518 = vst [vmem:[#allocation2 + $0xe0] sm:$0xff] %v383
    %519 = vst [vmem:[#allocation2 + $0xe8] sm:$0xff] %v386
    %520 = vst [vmem:[#allocation2 + $0xf0] sm:$0xff] %v389
    %521 = vst [vmem:[#allocation2 + $0xf8] sm:$0xff] %v392
    %522 = vst [vmem:[#allocation2 + $0x100] sm:$0xff] %v395
    %523 = vst [vmem:[#allocation2 + $0x108] sm:$0xff] %v398
    %524 = vst [vmem:[#allocation2 + $0x110] sm:$0xff] %v401
    %525 = vst [vmem:[#allocation2 + $0x118] sm:$0xff] %v404
    %526 = vst [vmem:[#allocation2 + $0x120] sm:$0xff] %v407
    %527 = vst [vmem:[#allocation2 + $0x128] sm:$0xff] %v410
    %528 = vst [vmem:[#allocation2 + $0x130] sm:$0xff] %v413
    %529 = vst [vmem:[#allocation2 + $0x138] sm:$0xff] %v416
    %530 = vst [vmem:[#allocation2 + $0x140] sm:$0xff] %v419
    %531 = vst [vmem:[#allocation2 + $0x148] sm:$0xff] %v422
    %532 = vst [vmem:[#allocation2 + $0x150] sm:$0xff] %v425
    %533 = vst [vmem:[#allocation2 + $0x158] sm:$0xff] %v428
    %534 = vst [vmem:[#allocation2 + $0x160] sm:$0xff] %v431
    %535 = vst [vmem:[#allocation2 + $0x168] sm:$0xff] %v434
    %536 = vst [vmem:[#allocation2 + $0x170] sm:$0xff] %v437
    %537 = vst [vmem:[#allocation2 + $0x178] sm:$0xff] %v440
    %538 = vst [vmem:[#allocation2 + $0x180] sm:$0xff] %v443
    %539 = vst [vmem:[#allocation2 + $0x188] sm:$0xff] %v446
    %540 = vst [vmem:[#allocation2 + $0x190] sm:$0xff] %v449
    %541 = vst [vmem:[#allocation2 + $0x198] sm:$0xff] %v452
    %542 = vst [vmem:[#allocation2 + $0x1a0] sm:$0xff] %v455
    %543 = vst [vmem:[#allocation2 + $0x1a8] sm:$0xff] %v458
    %544 = vst [vmem:[#allocation2 + $0x1b0] sm:$0xff] %v461
    %545 = vst [vmem:[#allocation2 + $0x1b8] sm:$0xff] %v464
    %546 = vst [vmem:[#allocation2 + $0x1c0] sm:$0xff] %v467
    %547 = vst [vmem:[#allocation2 + $0x1c8] sm:$0xff] %v470
    %548 = vst [vmem:[#allocation2 + $0x1d0] sm:$0xff] %v473
    %549 = vst [vmem:[#allocation2 + $0x1d8] sm:$0xff] %v476
    %550 = vst [vmem:[#allocation2 + $0x1e0] sm:$0xff] %v479
    %551 = vst [vmem:[#allocation2 + $0x1e8] sm:$0xff] %v482
    %552 = vst [vmem:[#allocation2 + $0x1f0] sm:$0xff] %v485
    %553 = vst [vmem:[#allocation2 + $0x1f8] sm:$0xff] %v488
    // Predicated region
    $region14: #{tpu_custom_call.1} parent=1 // pred_check
      _
    $region15: #{tpu_custom_call.1} parent=1 // pred_check_branch
      %555 = sbr.rel (0) target = $region17
    $region16: #{tpu_custom_call.1} parent=1 // pred_region
      %557 = vsyncadd [#allocation3], 0
      %s558 = sshll.u32 [#allocation2], 4
      %s559 = int_to_ptr.vmem [resolvable:$true] %s558
      %s560 = sshll.u32 %s3, 4
      %s561 = int_to_ptr.hbm [resolvable:$true] %s560
      %566 = dma.vmem_to_hbm [thread:$0]  %s559, 8192, %s561, [#allocation3], 128, 128, 8
    $region17: #{tpu_custom_call.1} parent=1 // pred_fallthru
      _
    // Predicated region
    $region18: #{tpu_custom_call.1} parent=1 // pred_check
      _
    $region19: #{tpu_custom_call.1} parent=1 // pred_check_branch
      %568 = sbr.rel (0) target = $region21
    $region20: #{tpu_custom_call.1} parent=1 // pred_region
      %570 = dma.done [#allocation3], 8192
    $region21: #{tpu_custom_call.1} parent=1 // pred_fallthru
      _
    %571 = vsyncpa [#allocation3], 1

</llo_original>
